<compile_context>
chip_gen: v6e
topology: v6e:2x2x1
jax: 0.10.0
libtpu: 0.0.40
codegen_flags: <defaults>
</compile_context>

<pallas_src>
import jax
import jax.numpy as jnp
from jax.experimental import pallas as pl
from jax.experimental.pallas import tpu as pltpu


def _broadcast_rows_kernel(w_ref, o_ref):
    # w_ref: (1, F) constant row.  Its index_map is constant, so it stays
    #        resident in VMEM across the whole grid (DMA'd from HBM once).
    # o_ref: (Bn, F) output batch tile for grid step pl.program_id(0).
    o_ref[...] = jnp.broadcast_to(w_ref[...], o_ref.shape)


def _choose_batch_block(n: int, feat: int, itemsize: int) -> int:
    """Pick how many batch rows to write per grid step (~2 MiB blocks)."""
    target_bytes = 2 * 1024 * 1024
    bn = max(1, target_bytes // max(1, feat * itemsize))
    if bn >= n:
        # Single grid step; a full-extent block dim is exempt from the
        # (8, 128) divisibility rule.
        return n
    # Sub-full block: keep the second-to-last block dim a multiple of 8.
    bn = max(8, (bn // 8) * 8)
    return min(bn, n)


def input_forward(weight: jax.Array, n: int, *, block_batch: int | None = None) -> jax.Array:
    """Equivalent of Input.forward(n): weight.repeat(n, 1, 1, 1)."""
    _, c, s1, s2 = weight.shape
    feat = c * s1 * s2
    itemsize = jnp.dtype(weight.dtype).itemsize

    bn = block_batch if block_batch is not None else _choose_batch_block(n, feat, itemsize)

    # Free reshape: (1, C, S, S) row-major == (1, C*S*S) row-major.
    w_flat = weight.reshape(1, feat)

    out_flat = pl.pallas_call(
        _broadcast_rows_kernel,
        out_shape=jax.ShapeDtypeStruct((n, feat), weight.dtype),
        grid_spec=pltpu.PrefetchScalarGridSpec(
            num_scalar_prefetch=0,
            grid=(pl.cdiv(n, bn),),
            in_specs=[
                # Constant block index -> weight stays resident in VMEM.
                pl.BlockSpec((1, feat), lambda i: (0, 0)),
            ],
            out_specs=pl.BlockSpec((bn, feat), lambda i: (i, 0)),
        ),
        compiler_params=pltpu.CompilerParams(
            dimension_semantics=("parallel",),
        ),
        cost_estimate=pl.CostEstimate(
            flops=0,
            transcendentals=0,
            bytes_accessed=(n * feat + feat) * itemsize,
        ),
    )(w_flat)

    # Free reshape back to NCHW (same memory layout).
    return out_flat.reshape(n, c, s1, s2)


if __name__ == "__main__":
    channels = 4
    size = 4
    n = 2

    # Deterministic parameter init mirroring nn.init.normal_(self.weight).
    key = jax.random.PRNGKey(0)
    weight = jax.random.normal(key, (1, channels, size, size), dtype=jnp.float32)

    # Small case consistent with the module defaults.
    out = input_forward(weight, n)
    out = jax.block_until_ready(out)
    expected = jnp.tile(weight, (n, 1, 1, 1))
    assert out.shape == (n, channels, size, size), out.shape
    assert out.dtype == jnp.float32
    assert bool(jnp.allclose(out, expected)), "mismatch vs reference repeat"

    # Exercise the multi-step (batch-tiled) path explicitly.
    n2 = 16
    out2 = input_forward(weight, n2, block_batch=8)
    out2 = jax.block_until_ready(out2)
    expected2 = jnp.tile(weight, (n2, 1, 1, 1))
    assert out2.shape == (n2, channels, size, size), out2.shape
    assert bool(jnp.allclose(out2, expected2)), "mismatch vs reference repeat (tiled)"

    print("KERNEL_OK")
</pallas_src>

<mosaic_0001>
module attributes {stable_mosaic.version = 11 : i64} {
  func.func @_broadcast_rows_kernel(%arg0: i32, %arg1: memref<1x64xf32, #tpu.memory_space<vmem>>, %arg2: memref<2x64xf32, #tpu.memory_space<vmem>>) attributes {dimension_semantics = [#tpu.dimension_semantics<parallel>], iteration_bounds = array<i64: 1>, scalar_prefetch = 0 : i64, scratch_operands = 0 : i64, tpu.core_type = #tpu.core_type<tc>, window_params = [{pipeline_mode = #tpu.pipeline_mode<synchronous>, transform_indices = @transform_0, window_bounds = array<i64: 1, 64>}, {transform_indices = @transform_1, window_bounds = array<i64: 2, 64>}]} {
    %c0 = arith.constant 0 : index
    %c0_0 = arith.constant 0 : index
    %0 = vector.load %arg1[%c0, %c0_0] : memref<1x64xf32, #tpu.memory_space<vmem>>, vector<1x64xf32>
    %1 = vector.shape_cast %0 : vector<1x64xf32> to vector<1x64xf32>
    %2 = vector.broadcast %1 : vector<1x64xf32> to vector<2x64xf32>
    %c0_1 = arith.constant 0 : index
    %c0_2 = arith.constant 0 : index
    %3 = vector.load %arg2[%c0_1, %c0_2] : memref<2x64xf32, #tpu.memory_space<vmem>>, vector<2x64xf32>
    tpu.vector_store %arg2[%c0_1, %c0_2], %2 {strides = array<i32>} : memref<2x64xf32, #tpu.memory_space<vmem>>, vector<2x64xf32>,
    return
  }
  func.func @transform_0(%arg0: i32) -> (i32, i32) {
    %c0_i32 = arith.constant 0 : i32
    %c0_i32_0 = arith.constant 0 : i32
    %c0_i32_1 = arith.constant 0 : i32
    return %c0_i32, %c0_i32_0 : i32, i32
  }
  func.func @transform_1(%arg0: i32) -> (i32, i32) {
    %c0_i32 = arith.constant 0 : i32
    %c0_i32_0 = arith.constant 0 : i32
    return %arg0, %c0_i32 : i32, i32
  }
}

</mosaic_0001>

<llo_original>
// kernel: tpu_custom_call.1
$region0: #{tpu_custom_call.1}
  #allocation0 [shape = 'u32[]', space=smem, size = 0x4, offset = 0x4, fixed_abs, tag = 'smem constant byte address 0x4 - core index']
  #allocation1 [shape = 'u32[144,128]{1,0:T(1,128)}', space=vmem, size = 0x12000, scoped, tag = 'internal scratch']
  %s0 = inlined_call_operand.hbm [shape: f32[1,64], index: 0, kind: input, shape index: {}]
  %s1 = inlined_call_operand.hbm [shape: f32[2,64], index: 1, kind: output, shape index: {}]
  %s2 = sld [smem:[#allocation0]]
  $region18: #{tpu_custom_call.1} parent=0
    _
  %s4 = ssub.s32 1, %s2
  %s5 = scalar_select 0, %s4, %s2
  $region1: #{tpu_custom_call.1} parent=0
    #allocation2 [shape = 'u8[512]{0}', space=vmem, size = 0x400, scoped, tag = 'input window, operand 0, single buffered']
    #allocation3 [shape = 's32[1]{0}', space=sflag, size = 0x4, scoped, tag = 'scoped memory for tpu_custom_call.1']
    #allocation4 [shape = 's32[1]{0}', space=sflag, size = 0x4, scoped, tag = 'scoped memory for tpu_custom_call.1']
    #allocation5 [shape = 'u8[1024]{0}', space=vmem, size = 0x400, scoped, tag = 'output window, operand 0, single buffered']
    %6 = vsyncpa [#allocation3], 0
    %7 = vsyncpa [#allocation4], 0
    // Predicated region
    $region2: #{tpu_custom_call.1} parent=1 // pred_check
      _
    $region3: #{tpu_custom_call.1} parent=1 // pred_check_branch
      %9 = sbr.rel (0) target = $region5
    $region4: #{tpu_custom_call.1} parent=1 // pred_region
      %s11 = ssub.s32 16, 16
      %12 = vsyncadd [#allocation3], %s11
      %s14 = sshll.u32 [#allocation2], 4
      %s15 = int_to_ptr.vmem [resolvable:$true] %s14
      %17 = dma.hbm_to_vmem [thread:$0]  %s0, 16, %s15, [#allocation3]
    $region5: #{tpu_custom_call.1} parent=1 // pred_fallthru
      _
    // Predicated region
    $region6: #{tpu_custom_call.1} parent=1 // pred_check
      _
    $region7: #{tpu_custom_call.1} parent=1 // pred_check_branch
      %19 = sbr.rel (0) target = $region9
    $region8: #{tpu_custom_call.1} parent=1 // pred_region
      %20 = dma.done [#allocation3], 16
    $region9: #{tpu_custom_call.1} parent=1 // pred_fallthru
      _
    %v21 = vld [vmem:[#allocation2] sm:$0x1]
    %v23 = vlaneseq
    %v24 = vshrl.u32 %v23, 7
    %v25 = vsub.s32 0, %v24
    %v26 = vrot.slane %v21, %v25
    %vm28 = vcmask 517120
    %29 = vst.msk [vmem:[#allocation5] sm:$0x3] %vm28, %v26
    // Predicated region
    $region10: #{tpu_custom_call.1} parent=1 // pred_check
      _
    $region11: #{tpu_custom_call.1} parent=1 // pred_check_branch
      %31 = sbr.rel (0) target = $region13
    $region12: #{tpu_custom_call.1} parent=1 // pred_region
      %s33 = ssub.s32 32, 32
      %34 = vsyncadd [#allocation4], %s33
      %s36 = sshll.u32 [#allocation5], 4
      %s37 = int_to_ptr.vmem [resolvable:$true] %s36
      %39 = dma.vmem_to_hbm [thread:$0]  %s37, 32, %s1, [#allocation4]
    $region13: #{tpu_custom_call.1} parent=1 // pred_fallthru
      _
    // Predicated region
    $region14: #{tpu_custom_call.1} parent=1 // pred_check
      _
    $region15: #{tpu_custom_call.1} parent=1 // pred_check_branch
      %41 = sbr.rel (0) target = $region17
    $region16: #{tpu_custom_call.1} parent=1 // pred_region
      %42 = dma.done [#allocation4], 32
    $region17: #{tpu_custom_call.1} parent=1 // pred_fallthru
      _
    %43 = vsyncpa [#allocation3], 1
    %44 = vsyncpa [#allocation4], 1

</llo_original>
